<compile_context>
chip_gen: v7x
topology: tpu7x:2x2x1
jax: 0.10.0
libtpu: 0.0.40
codegen_flags: <defaults>
</compile_context>

<pallas_src>
import functools
import math

import numpy as np
import jax
import jax.numpy as jnp
from jax.experimental import pallas as pl
from jax.experimental.pallas import tpu as pltpu


def make_pe(max_seq_len: int, embed_dim: int) -> jnp.ndarray:
    """Positional-encoding buffer, exactly as the PyTorch __init__ builds it.

    NOTE: like the reference, requires even embed_dim (it writes pe[pos, i+1]).
    """
    pe = np.zeros((max_seq_len, embed_dim), dtype=np.float32)
    for pos in range(max_seq_len):
        for i in range(0, embed_dim, 2):
            pe[pos, i] = math.sin(pos / 10000 ** (2 * i / embed_dim))
            pe[pos, i + 1] = math.cos(pos / 10000 ** (2 * (i + 1) / embed_dim))
    return jnp.asarray(pe)[None]  # (1, max_seq_len, embed_dim)


def _pos_enc_kernel(x_ref, pe_ref, o_ref, *, scale):
    # x_ref : (TILE_R, W) VMEM tile
    # pe_ref: (1, W)      resident pe row; VPU broadcasts it over the sublane axis for free.
    o_ref[...] = (x_ref[...] * scale + pe_ref[...]).astype(o_ref.dtype)


def _pick_tile_rows(r2: int, row_bytes: int, sublane: int) -> int:
    """Row-tile size: ~2 MiB blocks, >= 8 grid steps when possible, divisor of r2 preferred."""
    target_bytes = 2 * 1024 * 1024
    cand = max(sublane, (target_bytes // max(row_bytes, 1)) // sublane * sublane)
    # Keep >= 8 grid steps (>= ~4 per TensorCore under the v7x "parallel" split) so the
    # per-core pipeline actually overlaps inbound DMA / compute / writeback.
    cap = (r2 // 8) // sublane * sublane
    if cap >= sublane:
        cand = min(cand, cap)
    if cand >= r2:
        return r2                      # single full-extent block (always layout-legal)
    if r2 % cand == 0:
        return cand
    # Prefer the largest sublane-aligned divisor of r2 at or below the candidate.
    t = cand
    while t >= sublane:
        if r2 % t == 0:
            return t
        t -= sublane
    return cand                        # fall back to a ragged last tile via cdiv grid


def positional_encoding_forward(x: jnp.ndarray, pe: jnp.ndarray) -> jnp.ndarray:
    """x: (B, S, D); pe: (1, max_seq_len, D) buffer built by make_pe."""
    B, S, D = x.shape
    scale = math.sqrt(D)

    # Faithful to the reference: pe[:, :, seq_len] -> shape (1, max_seq_len).
    assert S < pe.shape[2], "reference indexes pe's last axis at seq_len; need seq_len < embed_dim"
    pe_row = pe[:, :, S]                       # (1, max_seq_len)
    M = pe_row.shape[1]
    assert M == D, f"reference broadcast requires max_seq_len == embed_dim, got {M} vs {D}"

    rows = B * S

    # Lane-density: fold lcm(D,128)//D logical rows per physical row when the row count divides
    # evenly, so the minor dim is a 128-multiple (unmasked vector loads/stores).
    fold = math.lcm(D, 128) // D
    if fold > 1 and rows % fold != 0:
        fold = 1                                # correct-but-not-lane-dense fallback

    width = D * fold
    r2 = rows // fold
    x2 = x.reshape(r2, width)
    pe_vec = (jnp.tile(pe_row, (1, fold)) if fold > 1 else pe_row).astype(x.dtype)  # (1, width)

    itemsize = jnp.dtype(x.dtype).itemsize
    sublane = max(8, 32 // itemsize)            # 8 for f32, 16 for bf16, 32 for int8/fp8
    tile_r = _pick_tile_rows(r2, width * itemsize, sublane)
    grid = (pl.cdiv(r2, tile_r),)

    kernel = functools.partial(_pos_enc_kernel, scale=scale)

    out = pl.pallas_call(
        kernel,
        out_shape=jax.ShapeDtypeStruct((r2, width), x.dtype),
        grid=grid,
        in_specs=[
            pl.BlockSpec((tile_r, width), lambda i: (i, 0)),
            pl.BlockSpec((1, width), lambda i: (0, 0)),   # constant index -> VMEM-resident
        ],
        out_specs=pl.BlockSpec((tile_r, width), lambda i: (i, 0)),
        compiler_params=pltpu.CompilerParams(
            dimension_semantics=("parallel",),            # megacore split on v7x
            vmem_limit_bytes=32 * 1024 * 1024,            # covers v5e's 16 MiB scoped default;
                                                          # well inside v7x's 64 MiB physical VMEM
        ),
    )(x2, pe_vec)
    return out.reshape(B, S, D)


if __name__ == "__main__":
    key = jax.random.PRNGKey(0)

    # Small shapes; the reference forward's broadcast requires max_seq_len == embed_dim
    # and seq_len < embed_dim.
    B, S, D = 2, 8, 32
    max_seq_len = 32
    x = jax.random.normal(key, (B, S, D), dtype=jnp.float32)
    pe = make_pe(max_seq_len, D)

    out = positional_encoding_forward(x, pe)
    jax.block_until_ready(out)

    # Pure-JAX reference (identical semantics to the PyTorch forward).
    ref = x * math.sqrt(D) + pe[:, :, S]
    assert out.shape == (B, S, D)
    assert jnp.allclose(out, ref, atol=1e-5), "mismatch vs reference (small)"

    # Larger shape exercising the byte-budgeted, multi-step tiled grid path
    # (D >= 128, grid of 8 parallel steps after the >=8-steps cap).
    B2, S2, D2 = 8, 128, 256
    x_big = jax.random.normal(jax.random.PRNGKey(1), (B2, S2, D2), dtype=jnp.float32)
    pe_big = make_pe(D2, D2)
    out_big = positional_encoding_forward(x_big, pe_big)
    jax.block_until_ready(out_big)
    ref_big = x_big * math.sqrt(D2) + pe_big[:, :, S2]
    assert jnp.allclose(out_big, ref_big, atol=1e-5), "mismatch vs reference (tiled)"

    # bf16 path: verifies dtype-aware sublane alignment (16) and the explicit output cast.
    B3, S3, D3 = 4, 16, 128
    x_bf = jax.random.normal(jax.random.PRNGKey(2), (B3, S3, D3), dtype=jnp.bfloat16)
    pe_bf = make_pe(D3, D3)
    out_bf = positional_encoding_forward(x_bf, pe_bf)
    jax.block_until_ready(out_bf)
    ref_bf = x_bf * math.sqrt(D3) + pe_bf[:, :, S3].astype(jnp.bfloat16)
    assert out_bf.dtype == jnp.bfloat16
    assert jnp.allclose(out_bf.astype(jnp.float32), ref_bf.astype(jnp.float32), atol=1e-2), \
        "mismatch vs reference (bf16)"

    print("KERNEL_OK")
</pallas_src>

<mosaic_0001>
module attributes {stable_mosaic.version = 11 : i64} {
  func.func @_pos_enc_kernel(%arg0: i32, %arg1: memref<4x128xf32, #tpu.memory_space<vmem>>, %arg2: memref<1x128xf32, #tpu.memory_space<vmem>>, %arg3: memref<4x128xf32, #tpu.memory_space<vmem>>) attributes {dimension_semantics = [#tpu.dimension_semantics<parallel>], iteration_bounds = array<i64: 1>, scalar_prefetch = 0 : i64, scratch_operands = 0 : i64, tpu.core_type = #tpu.core_type<tc>, window_params = [{transform_indices = @transform_0, window_bounds = array<i64: 4, 128>}, {pipeline_mode = #tpu.pipeline_mode<synchronous>, transform_indices = @transform_1, window_bounds = array<i64: 1, 128>}, {transform_indices = @transform_2, window_bounds = array<i64: 4, 128>}]} {
    %c0 = arith.constant 0 : index
    %c0_0 = arith.constant 0 : index
    %0 = vector.load %arg1[%c0, %c0_0] : memref<4x128xf32, #tpu.memory_space<vmem>>, vector<4x128xf32>
    %cst = arith.constant 5.65685415 : f32
    %1 = vector.broadcast %cst : f32 to vector<4x128xf32>
    %2 = arith.mulf %0, %1 : vector<4x128xf32>
    %c0_1 = arith.constant 0 : index
    %c0_2 = arith.constant 0 : index
    %3 = vector.load %arg2[%c0_1, %c0_2] : memref<1x128xf32, #tpu.memory_space<vmem>>, vector<1x128xf32>
    %4 = vector.broadcast %3 : vector<1x128xf32> to vector<4x128xf32>
    %5 = arith.addf %2, %4 : vector<4x128xf32>
    %c0_3 = arith.constant 0 : index
    %c0_4 = arith.constant 0 : index
    %6 = vector.load %arg3[%c0_3, %c0_4] : memref<4x128xf32, #tpu.memory_space<vmem>>, vector<4x128xf32>
    tpu.vector_store %arg3[%c0_3, %c0_4], %5 {strides = array<i32>} : memref<4x128xf32, #tpu.memory_space<vmem>>, vector<4x128xf32>,
    return
  }
  func.func @transform_0(%arg0: i32) -> (i32, i32) {
    %c0_i32 = arith.constant 0 : i32
    %c0_i32_0 = arith.constant 0 : i32
    return %arg0, %c0_i32 : i32, i32
  }
  func.func @transform_1(%arg0: i32) -> (i32, i32) {
    %c0_i32 = arith.constant 0 : i32
    %c0_i32_0 = arith.constant 0 : i32
    %c0_i32_1 = arith.constant 0 : i32
    return %c0_i32, %c0_i32_0 : i32, i32
  }
  func.func @transform_2(%arg0: i32) -> (i32, i32) {
    %c0_i32 = arith.constant 0 : i32
    %c0_i32_0 = arith.constant 0 : i32
    return %arg0, %c0_i32 : i32, i32
  }
}

</mosaic_0001>

<llo_original>
// kernel: tpu_custom_call.1
$region0: #{tpu_custom_call.1}
  #allocation0 [shape = 'u32[]', space=smem, size = 0x4, offset = 0x4, fixed_abs, tag = 'smem constant byte address 0x4 - core index']
  #allocation1 [shape = 'u32[144,128]{1,0:T(1,128)}', space=vmem, size = 0x12000, scoped, tag = 'internal scratch']
  %s0 = inlined_call_operand.hbm [shape: f32[4,128], index: 0, kind: input, shape index: {}]
  %s1 = inlined_call_operand.vmem [shape: f32[1,128], index: 1, kind: input, shape index: {}]
  %s2 = inlined_call_operand.hbm [shape: f32[4,128], index: 2, kind: output, shape index: {}]
  %s3 = sld [smem:[#allocation0]]
  $region22: #{tpu_custom_call.1} parent=0
    _
  %s5 = ssub.s32 1, %s3
  %s6 = scalar_select 0, %s5, %s3
  $region1: #{tpu_custom_call.1} parent=0
    #allocation2 [shape = 'u8[2048]{0}', space=vmem, size = 0x800, scoped, tag = 'input window, operand 0, single buffered']
    #allocation3 [shape = 's32[1]{0}', space=sflag, size = 0x4, scoped, tag = 'scoped memory for tpu_custom_call.1']
    #allocation4 [shape = 's32[1]{0}', space=sflag, size = 0x4, scoped, tag = 'scoped memory for tpu_custom_call.1']
    #allocation5 [shape = 'u8[2048]{0}', space=vmem, size = 0x800, scoped, tag = 'output window, operand 0, single buffered']
    %7 = vsyncpa [#allocation3], 0
    %8 = vsyncpa [#allocation4], 0
    // Predicated region
    $region2: #{tpu_custom_call.1} parent=1 // pred_check
      _
    $region3: #{tpu_custom_call.1} parent=1 // pred_check_branch
      %10 = sbr.rel (0) target = $region5
    $region4: #{tpu_custom_call.1} parent=1 // pred_region
      %s12 = ssub.s32 64, 64
      %13 = vsyncadd [#allocation3], %s12
      %s15 = sshll.u32 [#allocation2], 4
      %s16 = int_to_ptr.vmem [resolvable:$true] %s15
      %18 = dma.hbm_to_vmem [thread:$0]  %s0, 64, %s16, [#allocation3]
    $region5: #{tpu_custom_call.1} parent=1 // pred_fallthru
      _
    // Predicated region
    $region6: #{tpu_custom_call.1} parent=1 // pred_check
      _
    $region7: #{tpu_custom_call.1} parent=1 // pred_check_branch
      %20 = sbr.rel (0) target = $region9
    $region8: #{tpu_custom_call.1} parent=1 // pred_region
      _
    $region9: #{tpu_custom_call.1} parent=1 // pred_fallthru
      _
    // Predicated region
    $region10: #{tpu_custom_call.1} parent=1 // pred_check
      _
    $region11: #{tpu_custom_call.1} parent=1 // pred_check_branch
      %22 = sbr.rel (0) target = $region13
    $region12: #{tpu_custom_call.1} parent=1 // pred_region
      %23 = dma.done [#allocation3], 64
    $region13: #{tpu_custom_call.1} parent=1 // pred_fallthru
      _
    %v24 = vld [vmem:[#allocation2] sm:$0xf]
    %v25 = vmul.f32 %v24, 5.656854
    %v26 = vld [vmem:[%s1] sm:$0x1]
    %v28 = vlaneseq
    %v29 = vshrl.u32 %v28, 7
    %v30 = vsub.s32 0, %v29
    %v31 = vrot.slane %v26, %v30
    %v33 = vadd.f32 %v25, %v31
    %34 = vst [vmem:[#allocation5] sm:$0xf] %v33
    // Predicated region
    $region14: #{tpu_custom_call.1} parent=1 // pred_check
      _
    $region15: #{tpu_custom_call.1} parent=1 // pred_check_branch
      %36 = sbr.rel (0) target = $region17
    $region16: #{tpu_custom_call.1} parent=1 // pred_region
      %s38 = ssub.s32 64, 64
      %39 = vsyncadd [#allocation4], %s38
      %s41 = sshll.u32 [#allocation5], 4
      %s42 = int_to_ptr.vmem [resolvable:$true] %s41
      %44 = dma.vmem_to_hbm [thread:$0]  %s42, 64, %s2, [#allocation4]
    $region17: #{tpu_custom_call.1} parent=1 // pred_fallthru
      _
    // Predicated region
    $region18: #{tpu_custom_call.1} parent=1 // pred_check
      _
    $region19: #{tpu_custom_call.1} parent=1 // pred_check_branch
      %46 = sbr.rel (0) target = $region21
    $region20: #{tpu_custom_call.1} parent=1 // pred_region
      %47 = dma.done [#allocation4], 64
    $region21: #{tpu_custom_call.1} parent=1 // pred_fallthru
      _
    %48 = vsyncpa [#allocation3], 1
    %49 = vsyncpa [#allocation4], 1

</llo_original>
